<compile_context>
chip_gen: v7x
topology: tpu7x:2x2x1
jax: 0.10.0
libtpu: 0.0.40
codegen_flags: <defaults>
</compile_context>

<pallas_src>
import functools

import jax
import jax.numpy as jnp
from jax.experimental import pallas as pl
from jax.experimental.pallas import tpu as pltpu

LANE = 128
SUBLANE = 8


def _round_up(x, m):
    return ((x + m - 1) // m) * m


def dqn_kernel(x_ref, w1_ref, b1_ref, w2_ref, b2_ref, w3_ref, b3_ref, o_ref):
    wdt = w1_ref.dtype
    out_size = o_ref.shape[-1]  # static; true (unpadded) output width
    # Layer 1: Linear + ReLU (cast x to weight dtype only for the MXU operand).
    h1 = jnp.dot(x_ref[...].astype(wdt), w1_ref[...],
                 preferred_element_type=jnp.float32)
    h1 = jnp.maximum(h1 + b1_ref[...], 0.0)
    # Layer 2: Linear + ReLU.
    h2 = jnp.dot(h1.astype(wdt), w2_ref[...],
                 preferred_element_type=jnp.float32)
    h2 = jnp.maximum(h2 + b2_ref[...], 0.0)
    # Layer 3: Linear (no activation). Matmul stays 128-lane wide for the MXU,
    # but only the valid out_size columns are written to HBM.
    q = jnp.dot(h2.astype(wdt), w3_ref[...],
                preferred_element_type=jnp.float32)
    o_ref[...] = (q[:, :out_size] + b3_ref[...]).astype(o_ref.dtype)


def prepare_params(params, compute_dtype=None):
    """Pad feature dims to 128 lanes and (optionally) cast weights. Call ONCE
    (at init / after each optimizer step), not per forward call.

    params: dict of w1,b1,w2,b2,w3,b3 with w: [in, out], b: [1, out].
    compute_dtype: None -> keep weight dtype; "bfloat16" -> bf16 matmul operands
    (f32 MXU accumulation is preserved in the kernel).
    """
    in_size, hidden = params["w1"].shape
    out_size = params["w3"].shape[1]
    h_pad = _round_up(hidden, LANE)
    o_pad = _round_up(out_size, LANE)
    wdt = jnp.dtype(compute_dtype) if compute_dtype is not None else params["w1"].dtype

    def pad2(a, rows, cols):
        return jnp.pad(a, ((0, rows - a.shape[0]), (0, cols - a.shape[1])))

    return {
        "w1": pad2(params["w1"], in_size, h_pad).astype(wdt),
        "b1": pad2(params["b1"], 1, h_pad).astype(jnp.float32),
        "w2": pad2(params["w2"], h_pad, h_pad).astype(wdt),
        "b2": pad2(params["b2"], 1, h_pad).astype(jnp.float32),
        "w3": pad2(params["w3"], h_pad, o_pad).astype(wdt),
        # b3 stays unpadded: the kernel infers out_size from its shape and the
        # output store is done at the true width.
        "b3": params["b3"].astype(jnp.float32),
    }


@functools.partial(jax.jit, static_argnames=("block_b",))
def dqn_forward(x, padded, *, block_b=2048):
    """x: [B, input_size] (any float dtype); padded: output of prepare_params."""
    B, in_size = x.shape
    h_pad = padded["w1"].shape[1]
    o_pad = padded["w3"].shape[1]
    out_size = padded["b3"].shape[1]

    # Batch tile: multiple of 8 sublanes. Cap so the grid has >= 2 steps when
    # possible (both v7x TensorCores get work; negligible cost on v5e/v6e).
    tb = min(block_b, _round_up(B, SUBLANE))
    if B > SUBLANE and pl.cdiv(B, tb) < 2:
        tb = _round_up(pl.cdiv(B, 2), SUBLANE)
    grid = (pl.cdiv(B, tb),)

    def resident(shape):
        # Same block every grid step -> stays VMEM-resident, no re-DMA.
        return pl.BlockSpec(shape, lambda i: (0, 0))

    return pl.pallas_call(
        dqn_kernel,
        out_shape=jax.ShapeDtypeStruct((B, out_size), x.dtype),
        grid=grid,
        in_specs=[
            pl.BlockSpec((tb, in_size), lambda i: (i, 0)),   # x: streamed per tile
            resident((in_size, h_pad)),                      # w1
            resident((1, h_pad)),                            # b1
            resident((h_pad, h_pad)),                        # w2
            resident((1, h_pad)),                            # b2
            resident((h_pad, o_pad)),                        # w3
            resident((1, out_size)),                         # b3 (unpadded)
        ],
        out_specs=pl.BlockSpec((tb, out_size), lambda i: (i, 0)),
        compiler_params=pltpu.CompilerParams(
            dimension_semantics=("parallel",),
        ),
    )(x, padded["w1"], padded["b1"], padded["w2"], padded["b2"],
      padded["w3"], padded["b3"])


def init_params(key, input_size, num_hidden, output_size, dtype=jnp.float32):
    """Deterministic init mimicking PyTorch nn.Linear default (uniform +-1/sqrt(fan_in))."""
    keys = jax.random.split(key, 6)

    def linear_init(wk, bk, fan_in, fan_out):
        bound = 1.0 / jnp.sqrt(jnp.array(fan_in, dtype=jnp.float32))
        w = jax.random.uniform(wk, (fan_in, fan_out), dtype, -bound, bound)
        b = jax.random.uniform(bk, (1, fan_out), dtype, -bound, bound)
        return w, b

    w1, b1 = linear_init(keys[0], keys[1], input_size, num_hidden)
    w2, b2 = linear_init(keys[2], keys[3], num_hidden, num_hidden)
    w3, b3 = linear_init(keys[4], keys[5], num_hidden, output_size)
    return {"w1": w1, "b1": b1, "w2": w2, "b2": b2, "w3": w3, "b3": b3}


def dqn_reference(x, p):
    h1 = jnp.maximum(x @ p["w1"] + p["b1"], 0.0)
    h2 = jnp.maximum(h1 @ p["w2"] + p["b2"], 0.0)
    return h2 @ p["w3"] + p["b3"]


if __name__ == "__main__":
    input_size = 16
    num_hidden = 32
    output_size = 4

    key = jax.random.PRNGKey(0)
    k_x, k_p, k_x2 = jax.random.split(key, 3)
    params = init_params(k_p, input_size, num_hidden, output_size)

    # Pad / cast weights ONCE (hoisted out of the per-call forward path).
    padded_f32 = jax.tree_util.tree_map(jax.block_until_ready, prepare_params(params))

    # 1) Small batch (per-step action selection regime), f32.
    batch = 8
    x = jax.random.normal(k_x, (batch, input_size), jnp.float32)
    out = jax.block_until_ready(dqn_forward(x, padded_f32))
    ref = dqn_reference(x, params)
    assert out.shape == (batch, output_size)
    assert out.dtype == x.dtype
    assert jnp.allclose(out, ref, atol=1e-5, rtol=1e-5)

    # 2) Larger, non-tile-multiple batch (exercises ragged grid + masked write), f32.
    batch2 = 300
    x2 = jax.random.normal(k_x2, (batch2, input_size), jnp.float32)
    out2 = jax.block_until_ready(dqn_forward(x2, padded_f32, block_b=128))
    ref2 = dqn_reference(x2, params)
    assert out2.shape == (batch2, output_size)
    assert jnp.allclose(out2, ref2, atol=1e-5, rtol=1e-5)

    # 3) Default (large) tile on the same batch: grid gets >= 2 steps automatically.
    out2b = jax.block_until_ready(dqn_forward(x2, padded_f32))
    assert jnp.allclose(out2b, ref2, atol=1e-5, rtol=1e-5)

    # 4) bf16 weights (x stays f32 in HBM; cast happens in-kernel) — loose check.
    padded_bf16 = prepare_params(params, compute_dtype="bfloat16")
    out_bf16 = jax.block_until_ready(dqn_forward(x2, padded_bf16, block_b=128))
    assert out_bf16.shape == (batch2, output_size)
    assert jnp.allclose(out_bf16.astype(jnp.float32), ref2, atol=0.1, rtol=0.1)

    print("KERNEL_OK")
</pallas_src>

<mosaic_0001>
module attributes {stable_mosaic.version = 11 : i64} {
  func.func @dqn_kernel(%arg0: i32, %arg1: memref<8x16xf32, #tpu.memory_space<vmem>>, %arg2: memref<16x128xf32, #tpu.memory_space<vmem>>, %arg3: memref<1x128xf32, #tpu.memory_space<vmem>>, %arg4: memref<128x128xf32, #tpu.memory_space<vmem>>, %arg5: memref<1x128xf32, #tpu.memory_space<vmem>>, %arg6: memref<128x128xf32, #tpu.memory_space<vmem>>, %arg7: memref<1x4xf32, #tpu.memory_space<vmem>>, %arg8: memref<8x4xf32, #tpu.memory_space<vmem>>) attributes {dimension_semantics = [#tpu.dimension_semantics<parallel>], iteration_bounds = array<i64: 1>, scalar_prefetch = 0 : i64, scratch_operands = 0 : i64, tpu.core_type = #tpu.core_type<tc>, window_params = [{transform_indices = @transform_0, window_bounds = array<i64: 8, 16>}, {pipeline_mode = #tpu.pipeline_mode<synchronous>, transform_indices = @transform_1, window_bounds = array<i64: 16, 128>}, {pipeline_mode = #tpu.pipeline_mode<synchronous>, transform_indices = @transform_2, window_bounds = array<i64: 1, 128>}, {pipeline_mode = #tpu.pipeline_mode<synchronous>, transform_indices = @transform_3, window_bounds = array<i64: 128, 128>}, {pipeline_mode = #tpu.pipeline_mode<synchronous>, transform_indices = @transform_4, window_bounds = array<i64: 1, 128>}, {pipeline_mode = #tpu.pipeline_mode<synchronous>, transform_indices = @transform_5, window_bounds = array<i64: 128, 128>}, {pipeline_mode = #tpu.pipeline_mode<synchronous>, transform_indices = @transform_6, window_bounds = array<i64: 1, 4>}, {transform_indices = @transform_7, window_bounds = array<i64: 8, 4>}]} {
    %c0 = arith.constant 0 : index
    %c0_0 = arith.constant 0 : index
    %0 = vector.load %arg1[%c0, %c0_0] : memref<8x16xf32, #tpu.memory_space<vmem>>, vector<8x16xf32>
    %c0_1 = arith.constant 0 : index
    %c0_2 = arith.constant 0 : index
    %1 = vector.load %arg2[%c0_1, %c0_2] : memref<16x128xf32, #tpu.memory_space<vmem>>, vector<16x128xf32>
    %cst = arith.constant dense<0.000000e+00> : vector<8x128xf32>
    %2 = tpu.matmul %0, %1, %cst {dimension_numbers = #tpu.dot_dimension_numbers<[1], [0], [0], [1], [0, 0, 1, 1], [], []>} : vector<8x16xf32>, vector<16x128xf32>, vector<8x128xf32> -> vector<8x128xf32>
    %c0_3 = arith.constant 0 : index
    %c0_4 = arith.constant 0 : index
    %3 = vector.load %arg3[%c0_3, %c0_4] : memref<1x128xf32, #tpu.memory_space<vmem>>, vector<1x128xf32>
    %4 = vector.broadcast %3 : vector<1x128xf32> to vector<8x128xf32>
    %5 = arith.addf %2, %4 : vector<8x128xf32>
    %cst_5 = arith.constant 0.000000e+00 : f32
    %6 = vector.broadcast %cst_5 : f32 to vector<8x128xf32>
    %7 = arith.maximumf %5, %6 : vector<8x128xf32>
    %c0_6 = arith.constant 0 : index
    %c0_7 = arith.constant 0 : index
    %8 = vector.load %arg4[%c0_6, %c0_7] : memref<128x128xf32, #tpu.memory_space<vmem>>, vector<128x128xf32>
    %cst_8 = arith.constant dense<0.000000e+00> : vector<8x128xf32>
    %9 = tpu.matmul %7, %8, %cst_8 {dimension_numbers = #tpu.dot_dimension_numbers<[1], [0], [0], [1], [0, 0, 1, 1], [], []>} : vector<8x128xf32>, vector<128x128xf32>, vector<8x128xf32> -> vector<8x128xf32>
    %c0_9 = arith.constant 0 : index
    %c0_10 = arith.constant 0 : index
    %10 = vector.load %arg5[%c0_9, %c0_10] : memref<1x128xf32, #tpu.memory_space<vmem>>, vector<1x128xf32>
    %11 = vector.broadcast %10 : vector<1x128xf32> to vector<8x128xf32>
    %12 = arith.addf %9, %11 : vector<8x128xf32>
    %cst_11 = arith.constant 0.000000e+00 : f32
    %13 = vector.broadcast %cst_11 : f32 to vector<8x128xf32>
    %14 = arith.maximumf %12, %13 : vector<8x128xf32>
    %c0_12 = arith.constant 0 : index
    %c0_13 = arith.constant 0 : index
    %15 = vector.load %arg6[%c0_12, %c0_13] : memref<128x128xf32, #tpu.memory_space<vmem>>, vector<128x128xf32>
    %cst_14 = arith.constant dense<0.000000e+00> : vector<8x128xf32>
    %16 = tpu.matmul %14, %15, %cst_14 {dimension_numbers = #tpu.dot_dimension_numbers<[1], [0], [0], [1], [0, 0, 1, 1], [], []>} : vector<8x128xf32>, vector<128x128xf32>, vector<8x128xf32> -> vector<8x128xf32>
    %17 = vector.extract_strided_slice %16 {offsets = [0, 0], sizes = [8, 4], strides = [1, 1]} : vector<8x128xf32> to vector<8x4xf32>
    %c0_15 = arith.constant 0 : index
    %c0_16 = arith.constant 0 : index
    %18 = vector.load %arg7[%c0_15, %c0_16] : memref<1x4xf32, #tpu.memory_space<vmem>>, vector<1x4xf32>
    %19 = vector.broadcast %18 : vector<1x4xf32> to vector<8x4xf32>
    %20 = arith.addf %17, %19 : vector<8x4xf32>
    %c0_17 = arith.constant 0 : index
    %c0_18 = arith.constant 0 : index
    %21 = vector.load %arg8[%c0_17, %c0_18] : memref<8x4xf32, #tpu.memory_space<vmem>>, vector<8x4xf32>
    tpu.vector_store %arg8[%c0_17, %c0_18], %20 {strides = array<i32>} : memref<8x4xf32, #tpu.memory_space<vmem>>, vector<8x4xf32>,
    return
  }
  func.func @transform_0(%arg0: i32) -> (i32, i32) {
    %c0_i32 = arith.constant 0 : i32
    %c0_i32_0 = arith.constant 0 : i32
    return %arg0, %c0_i32 : i32, i32
  }
  func.func @transform_1(%arg0: i32) -> (i32, i32) {
    %c0_i32 = arith.constant 0 : i32
    %c0_i32_0 = arith.constant 0 : i32
    %c0_i32_1 = arith.constant 0 : i32
    return %c0_i32, %c0_i32_0 : i32, i32
  }
  func.func @transform_2(%arg0: i32) -> (i32, i32) {
    %c0_i32 = arith.constant 0 : i32
    %c0_i32_0 = arith.constant 0 : i32
    %c0_i32_1 = arith.constant 0 : i32
    return %c0_i32, %c0_i32_0 : i32, i32
  }
  func.func @transform_3(%arg0: i32) -> (i32, i32) {
    %c0_i32 = arith.constant 0 : i32
    %c0_i32_0 = arith.constant 0 : i32
    %c0_i32_1 = arith.constant 0 : i32
    return %c0_i32, %c0_i32_0 : i32, i32
  }
  func.func @transform_4(%arg0: i32) -> (i32, i32) {
    %c0_i32 = arith.constant 0 : i32
    %c0_i32_0 = arith.constant 0 : i32
    %c0_i32_1 = arith.constant 0 : i32
    return %c0_i32, %c0_i32_0 : i32, i32
  }
  func.func @transform_5(%arg0: i32) -> (i32, i32) {
    %c0_i32 = arith.constant 0 : i32
    %c0_i32_0 = arith.constant 0 : i32
    %c0_i32_1 = arith.constant 0 : i32
    return %c0_i32, %c0_i32_0 : i32, i32
  }
  func.func @transform_6(%arg0: i32) -> (i32, i32) {
    %c0_i32 = arith.constant 0 : i32
    %c0_i32_0 = arith.constant 0 : i32
    %c0_i32_1 = arith.constant 0 : i32
    return %c0_i32, %c0_i32_0 : i32, i32
  }
  func.func @transform_7(%arg0: i32) -> (i32, i32) {
    %c0_i32 = arith.constant 0 : i32
    %c0_i32_0 = arith.constant 0 : i32
    return %arg0, %c0_i32 : i32, i32
  }
}

</mosaic_0001>

<llo_original>
// kernel: dqn_forward.1
$region0: #{dqn_forward.1}
  #allocation0 [shape = 'u32[]', space=smem, size = 0x4, offset = 0x4, fixed_abs, tag = 'smem constant byte address 0x4 - core index']
  #allocation1 [shape = 'u32[144,128]{1,0:T(1,128)}', space=vmem, size = 0x12000, scoped, tag = 'internal scratch']
  %s0 = inlined_call_operand.hbm [shape: f32[8,16], index: 0, kind: input, shape index: {}]
  %s1 = inlined_call_operand.hbm [shape: f32[16,128], index: 1, kind: input, shape index: {}]
  %s2 = inlined_call_operand.vmem [shape: f32[1,128], index: 2, kind: input, shape index: {}]
  %s3 = inlined_call_operand.hbm [shape: f32[128,128], index: 3, kind: input, shape index: {}]
  %s4 = inlined_call_operand.vmem [shape: f32[1,128], index: 4, kind: input, shape index: {}]
  %s5 = inlined_call_operand.hbm [shape: f32[128,128], index: 5, kind: input, shape index: {}]
  %s6 = inlined_call_operand.vmem [shape: f32[1,4], index: 6, kind: input, shape index: {}]
  %s7 = inlined_call_operand.vmem [shape: f32[8,4], index: 7, kind: output, shape index: {}]
  %s8 = sld [smem:[#allocation0]]
  $region54: #{dqn_forward.1} parent=0
    _
  %s10 = ssub.s32 1, %s8
  %s11 = scalar_select 0, %s10, %s8
  $region1: #{dqn_forward.1} parent=0
    #allocation2 [shape = 'u8[4096]{0}', space=vmem, size = 0x1000, scoped, tag = 'input window, operand 0, single buffered']
    #allocation3 [shape = 's32[1]{0}', space=sflag, size = 0x4, scoped, tag = 'scoped memory for dqn_forward.1']
    #allocation4 [shape = 'u8[8192]{0}', space=vmem, size = 0x2000, scoped, tag = 'input window, operand 1, single buffered']
    #allocation5 [shape = 's32[1]{0}', space=sflag, size = 0x4, scoped, tag = 'scoped memory for dqn_forward.1']
    #allocation6 [shape = 'u8[65536]{0}', space=vmem, size = 0x10000, scoped, tag = 'input window, operand 3, single buffered']
    #allocation7 [shape = 'u8[65536]{0}', space=vmem, size = 0x10000, scoped, tag = 'input window, operand 5, single buffered']
    #allocation8 [shape = 's32[1]{0}', space=sflag, size = 0x4, scoped, tag = 'scoped memory for dqn_forward.1']
    %12 = vsyncpa [#allocation3], 0
    %13 = vsyncpa [#allocation5], 0
    %14 = vsyncpa [#allocation8], 0
    // Predicated region
    $region2: #{dqn_forward.1} parent=1 // pred_check
      _
    $region3: #{dqn_forward.1} parent=1 // pred_check_branch
      %16 = sbr.rel (0) target = $region5
    $region4: #{dqn_forward.1} parent=1 // pred_region
      %s18 = ssub.s32 128, 128
      %19 = vsyncadd [#allocation3], %s18
      %s21 = sshll.u32 [#allocation2], 4
      %s22 = int_to_ptr.vmem [resolvable:$true] %s21
      %24 = dma.hbm_to_vmem [thread:$0]  %s0, 128, %s22, [#allocation3]
    $region5: #{dqn_forward.1} parent=1 // pred_fallthru
      _
    // Predicated region
    $region6: #{dqn_forward.1} parent=1 // pred_check
      _
    $region7: #{dqn_forward.1} parent=1 // pred_check_branch
      %26 = sbr.rel (0) target = $region9
    $region8: #{dqn_forward.1} parent=1 // pred_region
      %s28 = ssub.s32 256, 256
      %29 = vsyncadd [#allocation5], %s28
      %s30 = sshll.u32 [#allocation4], 4
      %s31 = int_to_ptr.vmem [resolvable:$true] %s30
      %36 = dma.hbm_to_vmem [thread:$0]  %s1, 256, %s31, [#allocation5], 128, 128, 8
    $region9: #{dqn_forward.1} parent=1 // pred_fallthru
      _
    // Predicated region
    $region10: #{dqn_forward.1} parent=1 // pred_check
      _
    $region11: #{dqn_forward.1} parent=1 // pred_check_branch
      %38 = sbr.rel (0) target = $region13
    $region12: #{dqn_forward.1} parent=1 // pred_region
      _
    $region13: #{dqn_forward.1} parent=1 // pred_fallthru
      _
    // Predicated region
    $region14: #{dqn_forward.1} parent=1 // pred_check
      _
    $region15: #{dqn_forward.1} parent=1 // pred_check_branch
      %40 = sbr.rel (0) target = $region17
    $region16: #{dqn_forward.1} parent=1 // pred_region
      %s42 = ssub.s32 2048, 2048
      %43 = vsyncadd [#allocation5], %s42
      %s44 = sshll.u32 [#allocation6], 4
      %s45 = int_to_ptr.vmem [resolvable:$true] %s44
      %50 = dma.hbm_to_vmem [thread:$0]  %s3, 2048, %s45, [#allocation5], 128, 128, 8
    $region17: #{dqn_forward.1} parent=1 // pred_fallthru
      _
    // Predicated region
    $region18: #{dqn_forward.1} parent=1 // pred_check
      _
    $region19: #{dqn_forward.1} parent=1 // pred_check_branch
      %52 = sbr.rel (0) target = $region21
    $region20: #{dqn_forward.1} parent=1 // pred_region
      _
    $region21: #{dqn_forward.1} parent=1 // pred_fallthru
      _
    // Predicated region
    $region22: #{dqn_forward.1} parent=1 // pred_check
      _
    $region23: #{dqn_forward.1} parent=1 // pred_check_branch
      %54 = sbr.rel (0) target = $region25
    $region24: #{dqn_forward.1} parent=1 // pred_region
      %s56 = ssub.s32 2048, 2048
      %57 = vsyncadd [#allocation8], %s56
      %s58 = sshll.u32 [#allocation7], 4
      %s59 = int_to_ptr.vmem [resolvable:$true] %s58
      %64 = dma.hbm_to_vmem [thread:$0]  %s5, 2048, %s59, [#allocation8], 128, 128, 8
    $region25: #{dqn_forward.1} parent=1 // pred_fallthru
      _
    // Predicated region
    $region26: #{dqn_forward.1} parent=1 // pred_check
      _
    $region27: #{dqn_forward.1} parent=1 // pred_check_branch
      %66 = sbr.rel (0) target = $region29
    $region28: #{dqn_forward.1} parent=1 // pred_region
      _
    $region29: #{dqn_forward.1} parent=1 // pred_fallthru
      _
    // Predicated region
    $region30: #{dqn_forward.1} parent=1 // pred_check
      _
    $region31: #{dqn_forward.1} parent=1 // pred_check_branch
      %68 = sbr.rel (0) target = $region33
    $region32: #{dqn_forward.1} parent=1 // pred_region
      %69 = dma.done [#allocation3], 128
    $region33: #{dqn_forward.1} parent=1 // pred_fallthru
      _
    // Predicated region
    $region34: #{dqn_forward.1} parent=1 // pred_check
      _
    $region35: #{dqn_forward.1} parent=1 // pred_check_branch
      %71 = sbr.rel (0) target = $region37
    $region36: #{dqn_forward.1} parent=1 // pred_region
      %72 = dma.done [#allocation5], 256
    $region37: #{dqn_forward.1} parent=1 // pred_fallthru
      _
    // Predicated region
    $region38: #{dqn_forward.1} parent=1 // pred_check
      _
    $region39: #{dqn_forward.1} parent=1 // pred_check_branch
      %74 = sbr.rel (0) target = $region41
    $region40: #{dqn_forward.1} parent=1 // pred_region
      %75 = dma.done [#allocation5], 2048
    $region41: #{dqn_forward.1} parent=1 // pred_fallthru
      _
    // Predicated region
    $region42: #{dqn_forward.1} parent=1 // pred_check
      _
    $region43: #{dqn_forward.1} parent=1 // pred_check_branch
      %77 = sbr.rel (0) target = $region45
    $region44: #{dqn_forward.1} parent=1 // pred_region
      %78 = dma.done [#allocation8], 2048
    $region45: #{dqn_forward.1} parent=1 // pred_fallthru
      _
    %v79 = vld [vmem:[#allocation2] sm:$0xff]
    %v80 = vld [vmem:[#allocation4] sm:$0xff]
    %v81 = vld [vmem:[#allocation4 + $0x8] sm:$0xff]
    %v82 = vld [vmem:[%s2] sm:$0x1]
    %v84 = vlaneseq
    %v85 = vshrl.u32 %v84, 7
    %v86 = vsub.s32 0, %v85
    %v87 = vrot.slane %v82, %v86
    %vm89 = vcmask 130048
    %v91 = vsel %vm89, %v79, 0
    %93 = vmatprep.subr.mxu0 0.0
    %94 = vmatpush1.msra.mxu0 %v80
    %95 = vmatprep.subr.mxu0 0.0
    %96 = vmatpush1.msra.mxu0 %v81
    %97 = vmatprep.subr.mxu0 0.0
    %98 = vmatpush1.msra.mxu0 0.0
    %99 = vmatprep.subr.mxu0 0.0
    %100 = vmatpush1.msra.mxu0 0.0
    %101 = vmatprep.subr.mxu0 0.0
    %102 = vmatpush1.msra.mxu0 0.0
    %103 = vmatprep.subr.mxu0 0.0
    %104 = vmatpush1.msra.mxu0 0.0
    %105 = vmatprep.subr.mxu0 0.0
    %106 = vmatpush1.msra.mxu0 0.0
    %107 = vmatprep.subr.mxu0 0.0
    %108 = vmatpush1.msra.mxu0 0.0
    %109 = vmatprep.subr.mxu0 0.0
    %110 = vmatpush1.msra.mxu0 0.0
    %111 = vmatprep.subr.mxu0 0.0
    %112 = vmatpush1.msra.mxu0 0.0
    %113 = vmatprep.subr.mxu0 0.0
    %114 = vmatpush1.msra.mxu0 0.0
    %115 = vmatprep.subr.mxu0 0.0
    %116 = vmatpush1.msra.mxu0 0.0
    %117 = vmatprep.subr.mxu0 0.0
    %118 = vmatpush1.msra.mxu0 0.0
    %119 = vmatprep.subr.mxu0 0.0
    %120 = vmatpush1.msra.mxu0 0.0
    %121 = vmatprep.subr.mxu0 0.0
    %122 = vmatpush1.msra.mxu0 0.0
    %123 = vmatprep.subr.mxu0 0.0
    %124 = vmatpush1.msra.mxu0 0.0
    %125 = vmatprep.subr.mxu0 0.0
    %126 = vmatpush1.msra.mxu0 0.0
    %127 = vmatprep.subr.mxu0 0.0
    %128 = vmatpush1.msra.mxu0 0.0
    %129 = vmatprep.subr.mxu0 0.0
    %130 = vmatpush1.msra.mxu0 0.0
    %131 = vmatprep.subr.mxu0 0.0
    %132 = vmatpush1.msra.mxu0 0.0
    %133 = vmatprep.subr.mxu0 0.0
    %134 = vmatpush1.msra.mxu0 0.0
    %135 = vmatprep.subr.mxu0 0.0
    %136 = vmatpush1.msra.mxu0 0.0
    %137 = vmatprep.subr.mxu0 0.0
    %138 = vmatpush1.msra.mxu0 0.0
    %139 = vmatprep.subr.mxu0 0.0
    %140 = vmatpush1.msra.mxu0 0.0
    %141 = vmatprep.subr.mxu0 0.0
    %142 = vmatpush1.msra.mxu0 0.0
    %143 = vmatprep.subr.mxu0 0.0
    %144 = vmatpush1.msra.mxu0 0.0
    %145 = vmatprep.subr.mxu0 0.0
    %146 = vmatpush1.msra.mxu0 0.0
    %147 = vmatprep.subr.mxu0 0.0
    %148 = vmatpush1.msra.mxu0 0.0
    %149 = vmatprep.subr.mxu0 0.0
    %150 = vmatpush1.msra.mxu0 0.0
    %151 = vmatprep.subr.mxu0 0.0
    %152 = vmatpush1.msra.mxu0 0.0
    %153 = vmatprep.subr.mxu0 0.0
    %154 = vmatpush1.msra.mxu0 0.0
    %155 = vmatprep.subr.mxu0 0.0
    %156 = vmatpush1.msra.mxu0 0.0
    %157 = vmatprep.mubr.f32.mxu0 0.0
    %158 = vmatmul.mubr.f32.gmra.mrb[0].mxu0 %v91
    %v159 = vpop.f32.mrb[0].mxu0
    %v160 = vadd.f32 %v87, %v159
    %v161 = vpop.f32.mrb[0].mxu0
    %162 = vdwg.mxu0
    %v163 = vmax.f32 %v160, 0.0
    %v164 = vld [vmem:[#allocation6] sm:$0xff]
    %v165 = vld [vmem:[#allocation6 + $0x8] sm:$0xff]
    %v166 = vld [vmem:[#allocation6 + $0x10] sm:$0xff]
    %v167 = vld [vmem:[#allocation6 + $0x18] sm:$0xff]
    %v168 = vld [vmem:[#allocation6 + $0x20] sm:$0xff]
    %v169 = vld [vmem:[#allocation6 + $0x28] sm:$0xff]
    %v170 = vld [vmem:[#allocation6 + $0x30] sm:$0xff]
    %v171 = vld [vmem:[#allocation6 + $0x38] sm:$0xff]
    %v172 = vld [vmem:[#allocation6 + $0x40] sm:$0xff]
    %v173 = vld [vmem:[#allocation6 + $0x48] sm:$0xff]
    %v174 = vld [vmem:[#allocation6 + $0x50] sm:$0xff]
    %v175 = vld [vmem:[#allocation6 + $0x58] sm:$0xff]
    %v176 = vld [vmem:[#allocation6 + $0x60] sm:$0xff]
    %v177 = vld [vmem:[#allocation6 + $0x68] sm:$0xff]
    %v178 = vld [vmem:[#allocation6 + $0x70] sm:$0xff]
    %v179 = vld [vmem:[#allocation6 + $0x78] sm:$0xff]
    %v180 = vld [vmem:[%s4] sm:$0x1]
    %v182 = vlaneseq
    %v183 = vshrl.u32 %v182, 7
    %v184 = vsub.s32 0, %v183
    %v185 = vrot.slane %v180, %v184
    %187 = vmatprep.subr.mxu0 0.0
    %188 = vmatpush1.msra.mxu0 %v164
    %189 = vmatprep.subr.mxu0 0.0
    %190 = vmatpush1.msra.mxu0 %v165
    %191 = vmatprep.subr.mxu0 0.0
    %192 = vmatpush1.msra.mxu0 %v166
    %193 = vmatprep.subr.mxu0 0.0
    %194 = vmatpush1.msra.mxu0 %v167
    %195 = vmatprep.subr.mxu0 0.0
    %196 = vmatpush1.msra.mxu0 %v168
    %197 = vmatprep.subr.mxu0 0.0
    %198 = vmatpush1.msra.mxu0 %v169
    %199 = vmatprep.subr.mxu0 0.0
    %200 = vmatpush1.msra.mxu0 %v170
    %201 = vmatprep.subr.mxu0 0.0
    %202 = vmatpush1.msra.mxu0 %v171
    %203 = vmatprep.subr.mxu0 0.0
    %204 = vmatpush1.msra.mxu0 %v172
    %205 = vmatprep.subr.mxu0 0.0
    %206 = vmatpush1.msra.mxu0 %v173
    %207 = vmatprep.subr.mxu0 0.0
    %208 = vmatpush1.msra.mxu0 %v174
    %209 = vmatprep.subr.mxu0 0.0
    %210 = vmatpush1.msra.mxu0 %v175
    %211 = vmatprep.subr.mxu0 0.0
    %212 = vmatpush1.msra.mxu0 %v176
    %213 = vmatprep.subr.mxu0 0.0
    %214 = vmatpush1.msra.mxu0 %v177
    %215 = vmatprep.subr.mxu0 0.0
    %216 = vmatpush1.msra.mxu0 %v178
    %217 = vmatprep.subr.mxu0 0.0
    %218 = vmatpush1.msra.mxu0 %v179
    %219 = vmatprep.subr.mxu0 0.0
    %220 = vmatpush1.msra.mxu0 0.0
    %221 = vmatprep.subr.mxu0 0.0
    %222 = vmatpush1.msra.mxu0 0.0
    %223 = vmatprep.subr.mxu0 0.0
    %224 = vmatpush1.msra.mxu0 0.0
    %225 = vmatprep.subr.mxu0 0.0
    %226 = vmatpush1.msra.mxu0 0.0
    %227 = vmatprep.subr.mxu0 0.0
    %228 = vmatpush1.msra.mxu0 0.0
    %229 = vmatprep.subr.mxu0 0.0
    %230 = vmatpush1.msra.mxu0 0.0
    %231 = vmatprep.subr.mxu0 0.0
    %232 = vmatpush1.msra.mxu0 0.0
    %233 = vmatprep.subr.mxu0 0.0
    %234 = vmatpush1.msra.mxu0 0.0
    %235 = vmatprep.subr.mxu0 0.0
    %236 = vmatpush1.msra.mxu0 0.0
    %237 = vmatprep.subr.mxu0 0.0
    %238 = vmatpush1.msra.mxu0 0.0
    %239 = vmatprep.subr.mxu0 0.0
    %240 = vmatpush1.msra.mxu0 0.0
    %241 = vmatprep.subr.mxu0 0.0
    %242 = vmatpush1.msra.mxu0 0.0
    %243 = vmatprep.subr.mxu0 0.0
    %244 = vmatpush1.msra.mxu0 0.0
    %245 = vmatprep.subr.mxu0 0.0
    %246 = vmatpush1.msra.mxu0 0.0
    %247 = vmatprep.subr.mxu0 0.0
    %248 = vmatpush1.msra.mxu0 0.0
    %249 = vmatprep.subr.mxu0 0.0
    %250 = vmatpush1.msra.mxu0 0.0
    %251 = vmatprep.mubr.f32.mxu0 0.0
    %252 = vmatmul.mubr.f32.gmra.mrb[0].mxu0 %v163
    %v253 = vpop.f32.mrb[0].mxu0
    %v254 = vadd.f32 %v185, %v253
    %v255 = vpop.f32.mrb[0].mxu0
    %256 = vdwg.mxu0
    %v257 = vmax.f32 %v254, 0.0
    %v258 = vld [vmem:[#allocation7] sm:$0xff]
    %v259 = vld [vmem:[#allocation7 + $0x8] sm:$0xff]
    %v260 = vld [vmem:[#allocation7 + $0x10] sm:$0xff]
    %v261 = vld [vmem:[#allocation7 + $0x18] sm:$0xff]
    %v262 = vld [vmem:[#allocation7 + $0x20] sm:$0xff]
    %v263 = vld [vmem:[#allocation7 + $0x28] sm:$0xff]
    %v264 = vld [vmem:[#allocation7 + $0x30] sm:$0xff]
    %v265 = vld [vmem:[#allocation7 + $0x38] sm:$0xff]
    %v266 = vld [vmem:[#allocation7 + $0x40] sm:$0xff]
    %v267 = vld [vmem:[#allocation7 + $0x48] sm:$0xff]
    %v268 = vld [vmem:[#allocation7 + $0x50] sm:$0xff]
    %v269 = vld [vmem:[#allocation7 + $0x58] sm:$0xff]
    %v270 = vld [vmem:[#allocation7 + $0x60] sm:$0xff]
    %v271 = vld [vmem:[#allocation7 + $0x68] sm:$0xff]
    %v272 = vld [vmem:[#allocation7 + $0x70] sm:$0xff]
    %v273 = vld [vmem:[#allocation7 + $0x78] sm:$0xff]
    %274 = vmatprep.subr.mxu0 0.0
    %275 = vmatpush1.msra.mxu0 %v258
    %276 = vmatprep.subr.mxu0 0.0
    %277 = vmatpush1.msra.mxu0 %v259
    %278 = vmatprep.subr.mxu0 0.0
    %279 = vmatpush1.msra.mxu0 %v260
    %280 = vmatprep.subr.mxu0 0.0
    %281 = vmatpush1.msra.mxu0 %v261
    %282 = vmatprep.subr.mxu0 0.0
    %283 = vmatpush1.msra.mxu0 %v262
    %284 = vmatprep.subr.mxu0 0.0
    %285 = vmatpush1.msra.mxu0 %v263
    %286 = vmatprep.subr.mxu0 0.0
    %287 = vmatpush1.msra.mxu0 %v264
    %288 = vmatprep.subr.mxu0 0.0
    %289 = vmatpush1.msra.mxu0 %v265
    %290 = vmatprep.subr.mxu0 0.0
    %291 = vmatpush1.msra.mxu0 %v266
    %292 = vmatprep.subr.mxu0 0.0
    %293 = vmatpush1.msra.mxu0 %v267
    %294 = vmatprep.subr.mxu0 0.0
    %295 = vmatpush1.msra.mxu0 %v268
    %296 = vmatprep.subr.mxu0 0.0
    %297 = vmatpush1.msra.mxu0 %v269
    %298 = vmatprep.subr.mxu0 0.0
    %299 = vmatpush1.msra.mxu0 %v270
    %300 = vmatprep.subr.mxu0 0.0
    %301 = vmatpush1.msra.mxu0 %v271
    %302 = vmatprep.subr.mxu0 0.0
    %303 = vmatpush1.msra.mxu0 %v272
    %304 = vmatprep.subr.mxu0 0.0
    %305 = vmatpush1.msra.mxu0 %v273
    %306 = vmatprep.subr.mxu0 0.0
    %307 = vmatpush1.msra.mxu0 0.0
    %308 = vmatprep.subr.mxu0 0.0
    %309 = vmatpush1.msra.mxu0 0.0
    %310 = vmatprep.subr.mxu0 0.0
    %311 = vmatpush1.msra.mxu0 0.0
    %312 = vmatprep.subr.mxu0 0.0
    %313 = vmatpush1.msra.mxu0 0.0
    %314 = vmatprep.subr.mxu0 0.0
    %315 = vmatpush1.msra.mxu0 0.0
    %316 = vmatprep.subr.mxu0 0.0
    %317 = vmatpush1.msra.mxu0 0.0
    %318 = vmatprep.subr.mxu0 0.0
    %319 = vmatpush1.msra.mxu0 0.0
    %320 = vmatprep.subr.mxu0 0.0
    %321 = vmatpush1.msra.mxu0 0.0
    %322 = vmatprep.subr.mxu0 0.0
    %323 = vmatpush1.msra.mxu0 0.0
    %324 = vmatprep.subr.mxu0 0.0
    %325 = vmatpush1.msra.mxu0 0.0
    %326 = vmatprep.subr.mxu0 0.0
    %327 = vmatpush1.msra.mxu0 0.0
    %328 = vmatprep.subr.mxu0 0.0
    %329 = vmatpush1.msra.mxu0 0.0
    %330 = vmatprep.subr.mxu0 0.0
    %331 = vmatpush1.msra.mxu0 0.0
    %332 = vmatprep.subr.mxu0 0.0
    %333 = vmatpush1.msra.mxu0 0.0
    %334 = vmatprep.subr.mxu0 0.0
    %335 = vmatpush1.msra.mxu0 0.0
    %336 = vmatprep.subr.mxu0 0.0
    %337 = vmatpush1.msra.mxu0 0.0
    %338 = vmatprep.mubr.f32.mxu0 0.0
    %339 = vmatmul.mubr.f32.gmra.mrb[0].mxu0 %v257
    %v340 = vpop.f32.mrb[0].mxu0
    %v341 = vadd.f32 0.0, %v340
    %v342 = vpop.f32.mrb[0].mxu0
    %343 = vdwg.mxu0
    %v344 = vld [vmem:[%s6] sm:$0x1]
    %v346 = vlaneseq
    %v347 = vshrl.u32 %v346, 7
    %v348 = vsub.s32 0, %v347
    %v349 = vrot.slane %v344, %v348
    %v351 = vadd.f32 %v341, %v349
    %vm352 = vcmask 31744
    %353 = vst.msk [vmem:[%s7] sm:$0xff] %vm352, %v351
    // Predicated region
    $region46: #{dqn_forward.1} parent=1 // pred_check
      _
    $region47: #{dqn_forward.1} parent=1 // pred_check_branch
      %355 = sbr.rel (0) target = $region49
    $region48: #{dqn_forward.1} parent=1 // pred_region
      _
    $region49: #{dqn_forward.1} parent=1 // pred_fallthru
      _
    // Predicated region
    $region50: #{dqn_forward.1} parent=1 // pred_check
      _
    $region51: #{dqn_forward.1} parent=1 // pred_check_branch
      %357 = sbr.rel (0) target = $region53
    $region52: #{dqn_forward.1} parent=1 // pred_region
      _
    $region53: #{dqn_forward.1} parent=1 // pred_fallthru
      _
    %358 = vsyncpa [#allocation3], 1
    %359 = vsyncpa [#allocation5], 1
    %360 = vsyncpa [#allocation8], 1

</llo_original>
